<compile_context>
chip_gen: v7x
topology: tpu7x:2x2x1
jax: 0.10.0
libtpu: 0.0.40
codegen_flags: <defaults>
</compile_context>

<pallas_src>
import jax
import jax.numpy as jnp
from jax.experimental import pallas as pl
from jax.experimental.pallas import tpu as pltpu

_LANE = 128
_LANE_CANDIDATES = (8192, 4096, 2048, 1024, 512, 256, 128)
_TARGET_BLOCK_BYTES = 4 * 1024 * 1024   # ~4 MiB/block -> ~16 MiB resident w/ double-buffering
_SMALL_ARRAY_BYTES = 1 * 1024 * 1024    # below this a single block is fine (overhead-dominated)
_MIN_STEPS = 4                          # keep pipeline alive / shard across v7x TCs
_VMEM_LIMIT_BYTES = 32 * 1024 * 1024    # safe on v5e/v6e (128 MiB phys) and v7x (64 MiB phys)


def _tanh_kernel(x_ref, o_ref):
    # Elementwise tanh on the current VMEM tile (lowered to the EUP).
    o_ref[...] = jnp.tanh(x_ref[...])


def _sublane_multiple(dtype) -> int:
    # Sub-32-bit dtypes pack 2/4 rows per sublane.
    itemsize = jnp.dtype(dtype).itemsize
    return {4: 8, 2: 16, 1: 32}.get(itemsize, 8)


def _ceil_to(v: int, m: int) -> int:
    return -(-v // m) * m


def tanh_pallas(x: jax.Array) -> jax.Array:
    """Elementwise tanh via a Pallas TPU kernel. Matches torch.tanh(x) for float inputs."""
    orig_shape = x.shape
    dtype = x.dtype
    total = x.size
    if total == 0:
        return jnp.tanh(x)  # nothing to stream for empty inputs

    itemsize = jnp.dtype(dtype).itemsize
    sub = _sublane_multiple(dtype)

    # --- Lane-dense view: pad the flat buffer to a multiple of 128 so the lane
    # dim is always full-width (no masked vst.msk stores, no hidden padding).
    flat = x.reshape(-1)
    padded_total = _ceil_to(total, _LANE)
    if padded_total != total:
        flat = jnp.pad(flat, (0, padded_total - total))

    # Widest lane width that divides the padded total (prefer >= 8 rows).
    C = _LANE
    for cand in _LANE_CANDIDATES:
        if padded_total % cand == 0 and (padded_total // cand >= 8 or cand == _LANE):
            C = cand
            break
    M = padded_total // C
    x2 = flat.reshape(M, C)

    # --- Row tile: byte-budgeted, sublane-packing aligned, with >= _MIN_STEPS
    # near-equal blocks once the array exceeds ~1 MiB (pipelining + dual-TC).
    row_bytes = C * itemsize
    total_bytes = padded_total * itemsize
    if total_bytes <= _SMALL_ARRAY_BYTES or M <= sub:
        tm = M  # single full-extent block (legal even if M not 8-aligned)
    else:
        tm_cap = max(sub, (_TARGET_BLOCK_BYTES // row_bytes) // sub * sub)
        steps = max(_MIN_STEPS, pl.cdiv(M, tm_cap))
        steps = min(steps, pl.cdiv(M, sub))      # no more steps than sub-aligned chunks
        tm = _ceil_to(pl.cdiv(M, steps), sub)    # balanced, sublane-aligned tile
        if tm >= M:
            tm = M

    grid = (pl.cdiv(M, tm),)

    cost = pl.CostEstimate(
        flops=0,
        transcendentals=total,
        bytes_accessed=2 * total * itemsize,
    )

    out2 = pl.pallas_call(
        _tanh_kernel,
        out_shape=jax.ShapeDtypeStruct((M, C), dtype),
        grid_spec=pltpu.PrefetchScalarGridSpec(
            num_scalar_prefetch=0,
            grid=grid,
            in_specs=[pl.BlockSpec((tm, C), lambda i: (i, 0))],
            out_specs=pl.BlockSpec((tm, C), lambda i: (i, 0)),
        ),
        compiler_params=pltpu.CompilerParams(
            # Independent row tiles: lets megacore / dual-TC chips shard the grid.
            dimension_semantics=("parallel",),
            vmem_limit_bytes=_VMEM_LIMIT_BYTES,
        ),
        cost_estimate=cost,
    )(x2)

    out_flat = out2.reshape(-1)
    if padded_total != total:
        out_flat = out_flat[:total]
    return out_flat.reshape(orig_shape)


if __name__ == "__main__":
    key = jax.random.PRNGKey(0)
    # Small NCHW-like input consistent with a generic activation test.
    x = jax.random.normal(key, (2, 4, 16, 16), dtype=jnp.float32)

    y = tanh_pallas(x)
    jax.block_until_ready(y)

    # Correctness check against plain JAX tanh (== torch.tanh for floats).
    y_ref = jnp.tanh(x)
    assert y.shape == x.shape and y.dtype == x.dtype
    assert jnp.max(jnp.abs(y - y_ref)) < 1e-5

    print("KERNEL_OK")
</pallas_src>

<mosaic_0001>
module attributes {stable_mosaic.version = 11 : i64} {
  func.func @_tanh_kernel(%arg0: i32, %arg1: memref<8x256xf32, #tpu.memory_space<vmem>>, %arg2: memref<8x256xf32, #tpu.memory_space<vmem>>) attributes {dimension_semantics = [#tpu.dimension_semantics<parallel>], iteration_bounds = array<i64: 1>, scalar_prefetch = 0 : i64, scratch_operands = 0 : i64, tpu.core_type = #tpu.core_type<tc>, window_params = [{transform_indices = @transform_0, window_bounds = array<i64: 8, 256>}, {transform_indices = @transform_1, window_bounds = array<i64: 8, 256>}]} {
    %c0 = arith.constant 0 : index
    %c0_0 = arith.constant 0 : index
    %0 = vector.load %arg1[%c0, %c0_0] : memref<8x256xf32, #tpu.memory_space<vmem>>, vector<8x256xf32>
    %1 = math.tanh %0 : vector<8x256xf32>
    %c0_1 = arith.constant 0 : index
    %c0_2 = arith.constant 0 : index
    %2 = vector.load %arg2[%c0_1, %c0_2] : memref<8x256xf32, #tpu.memory_space<vmem>>, vector<8x256xf32>
    tpu.vector_store %arg2[%c0_1, %c0_2], %1 {strides = array<i32>} : memref<8x256xf32, #tpu.memory_space<vmem>>, vector<8x256xf32>,
    return
  }
  func.func @transform_0(%arg0: i32) -> (i32, i32) {
    %c0_i32 = arith.constant 0 : i32
    %c0_i32_0 = arith.constant 0 : i32
    return %arg0, %c0_i32 : i32, i32
  }
  func.func @transform_1(%arg0: i32) -> (i32, i32) {
    %c0_i32 = arith.constant 0 : i32
    %c0_i32_0 = arith.constant 0 : i32
    return %arg0, %c0_i32 : i32, i32
  }
}

</mosaic_0001>

<llo_original>
// kernel: tpu_custom_call.1
$region0: #{tpu_custom_call.1}
  #allocation0 [shape = 'u32[]', space=smem, size = 0x4, offset = 0x4, fixed_abs, tag = 'smem constant byte address 0x4 - core index']
  #allocation1 [shape = 'u32[144,128]{1,0:T(1,128)}', space=vmem, size = 0x12000, scoped, tag = 'internal scratch']
  %s0 = inlined_call_operand.hbm [shape: f32[8,256], index: 0, kind: input, shape index: {}]
  %s1 = inlined_call_operand.hbm [shape: f32[8,256], index: 1, kind: output, shape index: {}]
  %s2 = sld [smem:[#allocation0]]
  $region18: #{tpu_custom_call.1} parent=0
    _
  %s4 = ssub.s32 1, %s2
  %s5 = scalar_select 0, %s4, %s2
  $region1: #{tpu_custom_call.1} parent=0
    #allocation2 [shape = 'u8[8192]{0}', space=vmem, size = 0x2000, scoped, tag = 'input window, operand 0, single buffered']
    #allocation3 [shape = 's32[1]{0}', space=sflag, size = 0x4, scoped, tag = 'scoped memory for tpu_custom_call.1']
    #allocation4 [shape = 's32[1]{0}', space=sflag, size = 0x4, scoped, tag = 'scoped memory for tpu_custom_call.1']
    #allocation5 [shape = 'u8[8192]{0}', space=vmem, size = 0x2000, scoped, tag = 'output window, operand 0, single buffered']
    %6 = vsyncpa [#allocation3], 0
    %7 = vsyncpa [#allocation4], 0
    // Predicated region
    $region2: #{tpu_custom_call.1} parent=1 // pred_check
      _
    $region3: #{tpu_custom_call.1} parent=1 // pred_check_branch
      %9 = sbr.rel (0) target = $region5
    $region4: #{tpu_custom_call.1} parent=1 // pred_region
      %s11 = ssub.s32 256, 256
      %12 = vsyncadd [#allocation3], %s11
      %s14 = sshll.u32 [#allocation2], 4
      %s15 = int_to_ptr.vmem [resolvable:$true] %s14
      %17 = dma.hbm_to_vmem [thread:$0]  %s0, 256, %s15, [#allocation3]
    $region5: #{tpu_custom_call.1} parent=1 // pred_fallthru
      _
    // Predicated region
    $region6: #{tpu_custom_call.1} parent=1 // pred_check
      _
    $region7: #{tpu_custom_call.1} parent=1 // pred_check_branch
      %19 = sbr.rel (0) target = $region9
    $region8: #{tpu_custom_call.1} parent=1 // pred_region
      %20 = dma.done [#allocation3], 256
    $region9: #{tpu_custom_call.1} parent=1 // pred_fallthru
      _
    %v21 = vld [vmem:[#allocation2] sm:$0xff]
    %v22 = vld [vmem:[#allocation2 + $0x8] sm:$0xff]
    %v23 = vtanh.pop %v21
    %v24 = vtanh.pop %v22
    %25 = vst [vmem:[#allocation5] sm:$0xff] %v23
    %26 = vst [vmem:[#allocation5 + $0x8] sm:$0xff] %v24
    // Predicated region
    $region10: #{tpu_custom_call.1} parent=1 // pred_check
      _
    $region11: #{tpu_custom_call.1} parent=1 // pred_check_branch
      %28 = sbr.rel (0) target = $region13
    $region12: #{tpu_custom_call.1} parent=1 // pred_region
      %s30 = ssub.s32 256, 256
      %31 = vsyncadd [#allocation4], %s30
      %s33 = sshll.u32 [#allocation5], 4
      %s34 = int_to_ptr.vmem [resolvable:$true] %s33
      %36 = dma.vmem_to_hbm [thread:$0]  %s34, 256, %s1, [#allocation4]
    $region13: #{tpu_custom_call.1} parent=1 // pred_fallthru
      _
    // Predicated region
    $region14: #{tpu_custom_call.1} parent=1 // pred_check
      _
    $region15: #{tpu_custom_call.1} parent=1 // pred_check_branch
      %38 = sbr.rel (0) target = $region17
    $region16: #{tpu_custom_call.1} parent=1 // pred_region
      %39 = dma.done [#allocation4], 256
    $region17: #{tpu_custom_call.1} parent=1 // pred_fallthru
      _
    %40 = vsyncpa [#allocation3], 1
    %41 = vsyncpa [#allocation4], 1

</llo_original>
